<compile_context>
chip_gen: v7x
topology: tpu7x:2x2x1
jax: 0.10.0
libtpu: 0.0.40
codegen_flags: <defaults>
</compile_context>

<pallas_src>
import math
import functools

import jax
import jax.numpy as jnp
from jax import lax
from jax.experimental import pallas as pl
from jax.experimental.pallas import tpu as pltpu


# Matmul-operand dtype.  bf16 halves weight DMA bytes and runs the MXU at full
# bf16 rate on v5e/v6e/v7x; accumulation is f32 (preferred_element_type) and
# all elementwise math stays f32.  Flip to jnp.float32 for ~1e-6 parity with
# the f32 PyTorch reference.
MXU_DTYPE = jnp.bfloat16

_LANE = 128      # last dims padded to a multiple of the lane width
_SUBLANE = 8


def _round_up(n, m):
    return (n + m - 1) // m * m


def _erf(x):
    # Abramowitz & Stegun 7.1.26 (max abs err ~1.5e-7): exact-GELU erf in f32.
    # exp rides the EUP slot; the polynomial is a few VPU fmas.
    a1, a2, a3, a4, a5 = (0.254829592, -0.284496736, 1.421413741,
                          -1.453152027, 1.061405429)
    p = 0.3275911
    ax = jnp.abs(x)
    t = 1.0 / (1.0 + p * ax)
    poly = ((((a5 * t + a4) * t + a3) * t + a2) * t + a1) * t
    y = 1.0 - poly * jnp.exp(-ax * ax)
    return jnp.where(x < 0, -y, y)


def _decoder_layer_kernel(true_d, true_l,
                          x_ref, xsum_ref,
                          wv_ref, bv_ref, wlin_ref, blin_ref,
                          w1_ref, b1_ref, w2_ref, b2_ref,
                          ln1w_ref, ln1b_ref, ln2w_ref, ln2b_ref,
                          o_ref):
    f32 = jnp.float32
    x = x_ref[...]                                     # (TILE_L, Dp) f32

    # ---- attention branch (collapsed) --------------------------------------
    # attn[q, :] = sum_l V[l, :] = xsum @ Wv + L * bv  for every row q.
    # TODO(synk): nn.Dropout treated as identity (eval mode / deterministic).
    v_sum = jnp.dot(xsum_ref[...].astype(MXU_DTYPE), wv_ref[...],
                    preferred_element_type=f32) + float(true_l) * bv_ref[...]
    lin_row = jnp.dot(v_sum.astype(MXU_DTYPE), wlin_ref[...],
                      preferred_element_type=f32) + blin_ref[...]   # (1, Dp)

    # Lane-validity mask: D is zero-padded up to Dp; padded lanes hold exact
    # zeros everywhere, so only the LayerNorm variance needs masking (zero
    # lanes do not perturb the mean numerator).
    lane = lax.broadcasted_iota(jnp.int32, (1, x.shape[1]), 1)
    lane_valid = lane < true_d
    inv_d = 1.0 / float(true_d)

    def layer_norm(y, w, b):                           # biased var, eps=1e-5
        mu = jnp.sum(y, axis=-1, keepdims=True) * inv_d
        diff = jnp.where(lane_valid, y - mu, 0.0)
        var = jnp.sum(diff * diff, axis=-1, keepdims=True) * inv_d
        return diff * lax.rsqrt(var + 1e-5) * w + b    # padded lanes stay 0

    # ---- output projection + residual + LayerNorm1 -------------------------
    h1 = layer_norm(x + lin_row, ln1w_ref[...], ln1b_ref[...])

    # ---- feed-forward: Linear -> exact GELU -> Linear, residual + LN2 ------
    ff = jnp.dot(h1.astype(MXU_DTYPE), w1_ref[...],
                 preferred_element_type=f32) + b1_ref[...]      # bias in epilogue
    ff = 0.5 * ff * (1.0 + _erf(ff * (1.0 / math.sqrt(2.0))))   # nn.GELU() exact
    ff = jnp.dot(ff.astype(MXU_DTYPE), w2_ref[...],
                 preferred_element_type=f32) + b2_ref[...]

    o_ref[...] = layer_norm(h1 + ff, ln2w_ref[...], ln2b_ref[...]).astype(o_ref.dtype)


@functools.partial(jax.jit, static_argnames=("heads",))
def decoder_layer(x, params, *, heads):
    """Forward pass of DecoderLayer.  x: (B, L, D) float32, B must be 1."""
    B, L, D = x.shape
    assert B == 1, "reference mask.reshape(B,1,L,L) only admits B == 1"
    assert D % heads == 0
    (wqkv, bqkv, wlin, blin, w1, b1, w2, b2,
     ln1w, ln1b, ln2w, ln2b) = params
    inner = w1.shape[1]

    # Padded / tiled geometry: lane-dense last dims, sublane-aligned L tiles.
    Dp = _round_up(D, _LANE)
    Ip = _round_up(inner, _LANE)
    TILE_L = min(256, _round_up(L, _SUBLANE))
    Lp = _round_up(L, TILE_L)
    grid = (Lp // TILE_L,)

    def pad2(a, rows, cols, dt):
        a = a.astype(jnp.float32)
        return jnp.pad(a, ((0, rows - a.shape[0]),
                           (0, cols - a.shape[1]))).astype(dt)

    x2d = x.reshape(L, D).astype(jnp.float32)
    x_p = pad2(x2d, Lp, Dp, jnp.float32)
    # Column-sum of x over the TRUE rows; this breaks the only cross-tile
    # dependency of the collapsed attention branch, so the L grid is parallel.
    xsum = pad2(jnp.sum(x2d, axis=0, keepdims=True), 1, Dp, jnp.float32)

    # Only the V slice of the qkv projection is live (see kernel comment).
    wv, bv = wqkv[:, 2 * D:], bqkv[:, 2 * D:]

    consts = (
        xsum,
        pad2(wv, Dp, Dp, MXU_DTYPE),   pad2(bv, 1, Dp, jnp.float32),
        pad2(wlin, Dp, Dp, MXU_DTYPE), pad2(blin, 1, Dp, jnp.float32),
        pad2(w1, Dp, Ip, MXU_DTYPE),   pad2(b1, 1, Ip, jnp.float32),
        pad2(w2, Ip, Dp, MXU_DTYPE),   pad2(b2, 1, Dp, jnp.float32),
        pad2(ln1w, 1, Dp, jnp.float32), pad2(ln1b, 1, Dp, jnp.float32),
        pad2(ln2w, 1, Dp, jnp.float32), pad2(ln2b, 1, Dp, jnp.float32),
    )

    act_spec = pl.BlockSpec((TILE_L, Dp), lambda i: (i, 0))
    in_specs = [act_spec] + [pl.BlockSpec(c.shape, lambda i: (0, 0))
                             for c in consts]          # weights stay resident

    # VMEM budget: resident weights + double-buffered activation tiles + the
    # (TILE_L, Ip) f32 FFN intermediate, with 2x headroom; capped at 64 MiB so
    # the same plan fits v7x physical VMEM.
    wbytes = jnp.dtype(MXU_DTYPE).itemsize
    resident = wbytes * 2 * (Dp * Dp + Dp * Ip) + 4 * (8 * Dp + Ip)
    streamed = 4 * TILE_L * (4 * Dp + Ip)
    vmem_limit = int(min(64 * 2**20, max(32 * 2**20, 2 * (resident + streamed))))

    out = pl.pallas_call(
        functools.partial(_decoder_layer_kernel, D, L),
        out_shape=jax.ShapeDtypeStruct((Lp, Dp), jnp.float32),
        grid_spec=pltpu.PrefetchScalarGridSpec(
            num_scalar_prefetch=0,
            grid=grid,
            in_specs=in_specs,
            out_specs=pl.BlockSpec((TILE_L, Dp), lambda i: (i, 0)),
        ),
        compiler_params=pltpu.CompilerParams(
            dimension_semantics=("parallel",),   # v7x: L tiles over both TCs
            vmem_limit_bytes=vmem_limit,
        ),
    )(x_p, *consts)

    return out[:L, :D].reshape(B, L, D)


def init_params(key, d_model, inner_state):
    """Deterministic parameters matching the module's shapes (weights (in, out)).
    ff weights ~ N(0, 0.02) as in the reference __init__; rest small uniform."""
    ks = jax.random.split(key, 8)
    s = 1.0 / math.sqrt(d_model)
    si = 1.0 / math.sqrt(inner_state)
    wqkv = jax.random.uniform(ks[0], (d_model, 3 * d_model), jnp.float32, -s, s)
    bqkv = jax.random.uniform(ks[1], (1, 3 * d_model), jnp.float32, -s, s)
    wlin = jax.random.uniform(ks[2], (d_model, d_model), jnp.float32, -s, s)
    blin = jax.random.uniform(ks[3], (1, d_model), jnp.float32, -s, s)
    w1 = 0.02 * jax.random.normal(ks[4], (d_model, inner_state), jnp.float32)
    b1 = jax.random.uniform(ks[5], (1, inner_state), jnp.float32, -s, s)
    w2 = 0.02 * jax.random.normal(ks[6], (inner_state, d_model), jnp.float32)
    b2 = jax.random.uniform(ks[7], (1, d_model), jnp.float32, -si, si)
    ln1w = jnp.ones((1, d_model), jnp.float32)
    ln1b = jnp.zeros((1, d_model), jnp.float32)
    ln2w = jnp.ones((1, d_model), jnp.float32)
    ln2b = jnp.zeros((1, d_model), jnp.float32)
    return (wqkv, bqkv, wlin, blin, w1, b1, w2, b2, ln1w, ln1b, ln2w, ln2b)


def _layer_norm_ref(y, w, b, eps=1e-5):
    mu = jnp.mean(y, axis=-1, keepdims=True)
    var = jnp.mean((y - mu) ** 2, axis=-1, keepdims=True)
    return (y - mu) / jnp.sqrt(var + eps) * w + b


def decoder_layer_reference(x, params, *, heads):
    """Literal JAX transcription of the PyTorch forward (validation only)."""
    (wqkv, bqkv, wlin, blin, w1, b1, w2, b2,
     ln1w, ln1b, ln2w, ln2b) = params
    B, L, D = x.shape
    hd = D // heads
    qkv = x @ wqkv + bqkv
    q, k, v = jnp.split(qkv, 3, axis=-1)
    q = q.reshape(B, L, heads, hd)
    k = k.reshape(B, L, heads, hd)
    v = v.reshape(B, L, heads, hd)
    s = jnp.einsum('bqhd,bkhd->bhqk', q, k) / math.sqrt(D)
    mask = jnp.tril(jnp.ones((L, L))).reshape(B, 1, L, L)
    s = jnp.where(mask == 0, -jnp.inf, s)
    p = jax.nn.softmax(s, axis=3)
    attn = jnp.einsum('bhqk,bvhd->bqhd', p, v).reshape(B, L, D)
    lin = attn @ wlin + blin
    h1 = _layer_norm_ref(x + lin, ln1w, ln1b)
    ff = jax.nn.gelu(h1 @ w1 + b1, approximate=False) @ w2 + b2
    return _layer_norm_ref(h1 + ff, ln2w, ln2b)


if __name__ == "__main__":
    # config: d_model=32, heads=4, inner_state=64, dropout p treated as 0
    B, L, D, heads, inner = 1, 8, 32, 4, 64
    key = jax.random.PRNGKey(0)
    kx, kp = jax.random.split(key)
    x = jax.random.normal(kx, (B, L, D), dtype=jnp.float32)
    params = init_params(kp, D, inner)

    out = decoder_layer(x, params, heads=heads)
    jax.block_until_ready(out)

    assert out.shape == (B, L, D) and out.dtype == jnp.float32
    assert bool(jnp.all(jnp.isfinite(out)))

    # Check against a literal transcription of the PyTorch forward.  Tolerance
    # covers the bf16 matmul operands (set MXU_DTYPE=float32 for ~1e-6 match).
    ref = decoder_layer_reference(x, params, heads=heads)
    assert bool(jnp.allclose(out, ref, rtol=5e-2, atol=5e-2)), \
        float(jnp.max(jnp.abs(out - ref)))
    print("KERNEL_OK")
</pallas_src>

<mosaic_0001>
module attributes {stable_mosaic.version = 11 : i64} {
  func.func @_decoder_layer_kernel(%arg0: i32, %arg1: memref<8x128xf32, #tpu.memory_space<vmem>>, %arg2: memref<1x128xf32, #tpu.memory_space<vmem>>, %arg3: memref<128x128xbf16, #tpu.memory_space<vmem>>, %arg4: memref<1x128xf32, #tpu.memory_space<vmem>>, %arg5: memref<128x128xbf16, #tpu.memory_space<vmem>>, %arg6: memref<1x128xf32, #tpu.memory_space<vmem>>, %arg7: memref<128x128xbf16, #tpu.memory_space<vmem>>, %arg8: memref<1x128xf32, #tpu.memory_space<vmem>>, %arg9: memref<128x128xbf16, #tpu.memory_space<vmem>>, %arg10: memref<1x128xf32, #tpu.memory_space<vmem>>, %arg11: memref<1x128xf32, #tpu.memory_space<vmem>>, %arg12: memref<1x128xf32, #tpu.memory_space<vmem>>, %arg13: memref<1x128xf32, #tpu.memory_space<vmem>>, %arg14: memref<1x128xf32, #tpu.memory_space<vmem>>, %arg15: memref<8x128xf32, #tpu.memory_space<vmem>>) attributes {dimension_semantics = [#tpu.dimension_semantics<parallel>], iteration_bounds = array<i64: 1>, scalar_prefetch = 0 : i64, scratch_operands = 0 : i64, tpu.core_type = #tpu.core_type<tc>, window_params = [{transform_indices = @transform_0, window_bounds = array<i64: 8, 128>}, {pipeline_mode = #tpu.pipeline_mode<synchronous>, transform_indices = @transform_1, window_bounds = array<i64: 1, 128>}, {pipeline_mode = #tpu.pipeline_mode<synchronous>, transform_indices = @transform_2, window_bounds = array<i64: 128, 128>}, {pipeline_mode = #tpu.pipeline_mode<synchronous>, transform_indices = @transform_3, window_bounds = array<i64: 1, 128>}, {pipeline_mode = #tpu.pipeline_mode<synchronous>, transform_indices = @transform_4, window_bounds = array<i64: 128, 128>}, {pipeline_mode = #tpu.pipeline_mode<synchronous>, transform_indices = @transform_5, window_bounds = array<i64: 1, 128>}, {pipeline_mode = #tpu.pipeline_mode<synchronous>, transform_indices = @transform_6, window_bounds = array<i64: 128, 128>}, {pipeline_mode = #tpu.pipeline_mode<synchronous>, transform_indices = @transform_7, window_bounds = array<i64: 1, 128>}, {pipeline_mode = #tpu.pipeline_mode<synchronous>, transform_indices = @transform_8, window_bounds = array<i64: 128, 128>}, {pipeline_mode = #tpu.pipeline_mode<synchronous>, transform_indices = @transform_9, window_bounds = array<i64: 1, 128>}, {pipeline_mode = #tpu.pipeline_mode<synchronous>, transform_indices = @transform_10, window_bounds = array<i64: 1, 128>}, {pipeline_mode = #tpu.pipeline_mode<synchronous>, transform_indices = @transform_11, window_bounds = array<i64: 1, 128>}, {pipeline_mode = #tpu.pipeline_mode<synchronous>, transform_indices = @transform_12, window_bounds = array<i64: 1, 128>}, {pipeline_mode = #tpu.pipeline_mode<synchronous>, transform_indices = @transform_13, window_bounds = array<i64: 1, 128>}, {transform_indices = @transform_14, window_bounds = array<i64: 8, 128>}]} {
    %c0 = arith.constant 0 : index
    %c0_0 = arith.constant 0 : index
    %0 = vector.load %arg1[%c0, %c0_0] : memref<8x128xf32, #tpu.memory_space<vmem>>, vector<8x128xf32>
    %c0_1 = arith.constant 0 : index
    %c0_2 = arith.constant 0 : index
    %1 = vector.load %arg2[%c0_1, %c0_2] : memref<1x128xf32, #tpu.memory_space<vmem>>, vector<1x128xf32>
    %2 = arith.truncf %1 : vector<1x128xf32> to vector<1x128xbf16>
    %c0_3 = arith.constant 0 : index
    %c0_4 = arith.constant 0 : index
    %3 = vector.load %arg3[%c0_3, %c0_4] : memref<128x128xbf16, #tpu.memory_space<vmem>>, vector<128x128xbf16>
    %cst = arith.constant dense<0.000000e+00> : vector<1x128xf32>
    %4 = tpu.matmul %2, %3, %cst {dimension_numbers = #tpu.dot_dimension_numbers<[1], [0], [0], [1], [0, 0, 1, 1], [], []>} : vector<1x128xbf16>, vector<128x128xbf16>, vector<1x128xf32> -> vector<1x128xf32>
    %c0_5 = arith.constant 0 : index
    %c0_6 = arith.constant 0 : index
    %5 = vector.load %arg4[%c0_5, %c0_6] : memref<1x128xf32, #tpu.memory_space<vmem>>, vector<1x128xf32>
    %cst_7 = arith.constant 8.000000e+00 : f32
    %6 = vector.broadcast %cst_7 : f32 to vector<1x128xf32>
    %7 = arith.mulf %6, %5 : vector<1x128xf32>
    %8 = arith.addf %4, %7 : vector<1x128xf32>
    %9 = arith.truncf %8 : vector<1x128xf32> to vector<1x128xbf16>
    %c0_8 = arith.constant 0 : index
    %c0_9 = arith.constant 0 : index
    %10 = vector.load %arg5[%c0_8, %c0_9] : memref<128x128xbf16, #tpu.memory_space<vmem>>, vector<128x128xbf16>
    %cst_10 = arith.constant dense<0.000000e+00> : vector<1x128xf32>
    %11 = tpu.matmul %9, %10, %cst_10 {dimension_numbers = #tpu.dot_dimension_numbers<[1], [0], [0], [1], [0, 0, 1, 1], [], []>} : vector<1x128xbf16>, vector<128x128xbf16>, vector<1x128xf32> -> vector<1x128xf32>
    %c0_11 = arith.constant 0 : index
    %c0_12 = arith.constant 0 : index
    %12 = vector.load %arg6[%c0_11, %c0_12] : memref<1x128xf32, #tpu.memory_space<vmem>>, vector<1x128xf32>
    %13 = arith.addf %11, %12 : vector<1x128xf32>
    %14 = tpu.iota {dimensions = array<i32: 1>} : vector<1x128xi32>
    %c32_i32 = arith.constant 32 : i32
    %15 = vector.broadcast %c32_i32 : i32 to vector<1x128xi32>
    %16 = arith.cmpi slt, %14, %15 : vector<1x128xi32>
    %17 = vector.broadcast %13 : vector<1x128xf32> to vector<8x128xf32>
    %18 = arith.addf %0, %17 : vector<8x128xf32>
    %c0_13 = arith.constant 0 : index
    %c0_14 = arith.constant 0 : index
    %19 = vector.load %arg11[%c0_13, %c0_14] : memref<1x128xf32, #tpu.memory_space<vmem>>, vector<1x128xf32>
    %c0_15 = arith.constant 0 : index
    %c0_16 = arith.constant 0 : index
    %20 = vector.load %arg12[%c0_15, %c0_16] : memref<1x128xf32, #tpu.memory_space<vmem>>, vector<1x128xf32>
    %cst_17 = arith.constant dense<0.000000e+00> : vector<8xf32>
    %21 = vector.multi_reduction <add>, %18, %cst_17 [1] : vector<8x128xf32> to vector<8xf32>
    %22 = vector.shape_cast %21 : vector<8xf32> to vector<8x1xf32>
    %cst_18 = arith.constant 3.125000e-02 : f32
    %23 = vector.broadcast %cst_18 : f32 to vector<8x1xf32>
    %24 = arith.mulf %22, %23 : vector<8x1xf32>
    %25 = vector.broadcast %24 : vector<8x1xf32> to vector<8x128xf32>
    %26 = arith.subf %18, %25 : vector<8x128xf32>
    %cst_19 = arith.constant 0.000000e+00 : f32
    %27 = vector.shape_cast %16 : vector<1x128xi1> to vector<1x128xi1>
    %28 = vector.broadcast %27 : vector<1x128xi1> to vector<8x128xi1>
    %29 = vector.broadcast %cst_19 : f32 to vector<8x128xf32>
    %30 = arith.select %28, %26, %29 : vector<8x128xi1>, vector<8x128xf32>
    %31 = arith.mulf %30, %30 : vector<8x128xf32>
    %cst_20 = arith.constant dense<0.000000e+00> : vector<8xf32>
    %32 = vector.multi_reduction <add>, %31, %cst_20 [1] : vector<8x128xf32> to vector<8xf32>
    %33 = vector.shape_cast %32 : vector<8xf32> to vector<8x1xf32>
    %cst_21 = arith.constant 3.125000e-02 : f32
    %34 = vector.broadcast %cst_21 : f32 to vector<8x1xf32>
    %35 = arith.mulf %33, %34 : vector<8x1xf32>
    %cst_22 = arith.constant 9.99999974E-6 : f32
    %36 = vector.broadcast %cst_22 : f32 to vector<8x1xf32>
    %37 = arith.addf %35, %36 : vector<8x1xf32>
    %38 = math.rsqrt %37 : vector<8x1xf32>
    %39 = vector.broadcast %38 : vector<8x1xf32> to vector<8x128xf32>
    %40 = arith.mulf %30, %39 : vector<8x128xf32>
    %41 = vector.broadcast %19 : vector<1x128xf32> to vector<8x128xf32>
    %42 = arith.mulf %40, %41 : vector<8x128xf32>
    %43 = vector.broadcast %20 : vector<1x128xf32> to vector<8x128xf32>
    %44 = arith.addf %42, %43 : vector<8x128xf32>
    %45 = arith.truncf %44 : vector<8x128xf32> to vector<8x128xbf16>
    %c0_23 = arith.constant 0 : index
    %c0_24 = arith.constant 0 : index
    %46 = vector.load %arg7[%c0_23, %c0_24] : memref<128x128xbf16, #tpu.memory_space<vmem>>, vector<128x128xbf16>
    %cst_25 = arith.constant dense<0.000000e+00> : vector<8x128xf32>
    %47 = tpu.matmul %45, %46, %cst_25 {dimension_numbers = #tpu.dot_dimension_numbers<[1], [0], [0], [1], [0, 0, 1, 1], [], []>} : vector<8x128xbf16>, vector<128x128xbf16>, vector<8x128xf32> -> vector<8x128xf32>
    %c0_26 = arith.constant 0 : index
    %c0_27 = arith.constant 0 : index
    %48 = vector.load %arg8[%c0_26, %c0_27] : memref<1x128xf32, #tpu.memory_space<vmem>>, vector<1x128xf32>
    %49 = vector.broadcast %48 : vector<1x128xf32> to vector<8x128xf32>
    %50 = arith.addf %47, %49 : vector<8x128xf32>
    %cst_28 = arith.constant 5.000000e-01 : f32
    %51 = vector.broadcast %cst_28 : f32 to vector<8x128xf32>
    %52 = arith.mulf %51, %50 : vector<8x128xf32>
    %cst_29 = arith.constant 0.707106769 : f32
    %53 = vector.broadcast %cst_29 : f32 to vector<8x128xf32>
    %54 = arith.mulf %50, %53 : vector<8x128xf32>
    %55 = math.absf %54 : vector<8x128xf32>
    %cst_30 = arith.constant 0.327591091 : f32
    %56 = vector.broadcast %cst_30 : f32 to vector<8x128xf32>
    %57 = arith.mulf %56, %55 : vector<8x128xf32>
    %cst_31 = arith.constant 1.000000e+00 : f32
    %58 = vector.broadcast %cst_31 : f32 to vector<8x128xf32>
    %59 = arith.addf %58, %57 : vector<8x128xf32>
    %cst_32 = arith.constant 1.000000e+00 : f32
    %60 = vector.broadcast %cst_32 : f32 to vector<8x128xf32>
    %61 = arith.divf %60, %59 : vector<8x128xf32>
    %cst_33 = arith.constant 1.06140542 : f32
    %62 = vector.broadcast %cst_33 : f32 to vector<8x128xf32>
    %63 = arith.mulf %62, %61 : vector<8x128xf32>
    %cst_34 = arith.constant -1.45315206 : f32
    %64 = vector.broadcast %cst_34 : f32 to vector<8x128xf32>
    %65 = arith.addf %63, %64 : vector<8x128xf32>
    %66 = arith.mulf %65, %61 : vector<8x128xf32>
    %cst_35 = arith.constant 1.42141378 : f32
    %67 = vector.broadcast %cst_35 : f32 to vector<8x128xf32>
    %68 = arith.addf %66, %67 : vector<8x128xf32>
    %69 = arith.mulf %68, %61 : vector<8x128xf32>
    %cst_36 = arith.constant -0.284496725 : f32
    %70 = vector.broadcast %cst_36 : f32 to vector<8x128xf32>
    %71 = arith.addf %69, %70 : vector<8x128xf32>
    %72 = arith.mulf %71, %61 : vector<8x128xf32>
    %cst_37 = arith.constant 0.254829586 : f32
    %73 = vector.broadcast %cst_37 : f32 to vector<8x128xf32>
    %74 = arith.addf %72, %73 : vector<8x128xf32>
    %75 = arith.mulf %74, %61 : vector<8x128xf32>
    %cst_38 = arith.constant 0.000000e+00 : f32
    %76 = vector.broadcast %cst_38 : f32 to vector<8x128xf32>
    %77 = arith.subf %76, %55 : vector<8x128xf32>
    %78 = arith.mulf %77, %55 : vector<8x128xf32>
    %79 = math.exp %78 : vector<8x128xf32>
    %80 = arith.mulf %75, %79 : vector<8x128xf32>
    %cst_39 = arith.constant 1.000000e+00 : f32
    %81 = vector.broadcast %cst_39 : f32 to vector<8x128xf32>
    %82 = arith.subf %81, %80 : vector<8x128xf32>
    %cst_40 = arith.constant 0.000000e+00 : f32
    %83 = vector.broadcast %cst_40 : f32 to vector<8x128xf32>
    %84 = arith.cmpf olt, %54, %83 : vector<8x128xf32>
    %cst_41 = arith.constant 0.000000e+00 : f32
    %85 = vector.broadcast %cst_41 : f32 to vector<8x128xf32>
    %86 = arith.subf %85, %82 : vector<8x128xf32>
    %87 = arith.select %84, %86, %82 : vector<8x128xi1>, vector<8x128xf32>
    %cst_42 = arith.constant 1.000000e+00 : f32
    %88 = vector.broadcast %cst_42 : f32 to vector<8x128xf32>
    %89 = arith.addf %88, %87 : vector<8x128xf32>
    %90 = arith.mulf %52, %89 : vector<8x128xf32>
    %91 = arith.truncf %90 : vector<8x128xf32> to vector<8x128xbf16>
    %c0_43 = arith.constant 0 : index
    %c0_44 = arith.constant 0 : index
    %92 = vector.load %arg9[%c0_43, %c0_44] : memref<128x128xbf16, #tpu.memory_space<vmem>>, vector<128x128xbf16>
    %cst_45 = arith.constant dense<0.000000e+00> : vector<8x128xf32>
    %93 = tpu.matmul %91, %92, %cst_45 {dimension_numbers = #tpu.dot_dimension_numbers<[1], [0], [0], [1], [0, 0, 1, 1], [], []>} : vector<8x128xbf16>, vector<128x128xbf16>, vector<8x128xf32> -> vector<8x128xf32>
    %c0_46 = arith.constant 0 : index
    %c0_47 = arith.constant 0 : index
    %94 = vector.load %arg10[%c0_46, %c0_47] : memref<1x128xf32, #tpu.memory_space<vmem>>, vector<1x128xf32>
    %95 = vector.broadcast %94 : vector<1x128xf32> to vector<8x128xf32>
    %96 = arith.addf %93, %95 : vector<8x128xf32>
    %97 = arith.addf %44, %96 : vector<8x128xf32>
    %c0_48 = arith.constant 0 : index
    %c0_49 = arith.constant 0 : index
    %98 = vector.load %arg13[%c0_48, %c0_49] : memref<1x128xf32, #tpu.memory_space<vmem>>, vector<1x128xf32>
    %c0_50 = arith.constant 0 : index
    %c0_51 = arith.constant 0 : index
    %99 = vector.load %arg14[%c0_50, %c0_51] : memref<1x128xf32, #tpu.memory_space<vmem>>, vector<1x128xf32>
    %cst_52 = arith.constant dense<0.000000e+00> : vector<8xf32>
    %100 = vector.multi_reduction <add>, %97, %cst_52 [1] : vector<8x128xf32> to vector<8xf32>
    %101 = vector.shape_cast %100 : vector<8xf32> to vector<8x1xf32>
    %cst_53 = arith.constant 3.125000e-02 : f32
    %102 = vector.broadcast %cst_53 : f32 to vector<8x1xf32>
    %103 = arith.mulf %101, %102 : vector<8x1xf32>
    %104 = vector.broadcast %103 : vector<8x1xf32> to vector<8x128xf32>
    %105 = arith.subf %97, %104 : vector<8x128xf32>
    %cst_54 = arith.constant 0.000000e+00 : f32
    %106 = vector.shape_cast %16 : vector<1x128xi1> to vector<1x128xi1>
    %107 = vector.broadcast %106 : vector<1x128xi1> to vector<8x128xi1>
    %108 = vector.broadcast %cst_54 : f32 to vector<8x128xf32>
    %109 = arith.select %107, %105, %108 : vector<8x128xi1>, vector<8x128xf32>
    %110 = arith.mulf %109, %109 : vector<8x128xf32>
    %cst_55 = arith.constant dense<0.000000e+00> : vector<8xf32>
    %111 = vector.multi_reduction <add>, %110, %cst_55 [1] : vector<8x128xf32> to vector<8xf32>
    %112 = vector.shape_cast %111 : vector<8xf32> to vector<8x1xf32>
    %cst_56 = arith.constant 3.125000e-02 : f32
    %113 = vector.broadcast %cst_56 : f32 to vector<8x1xf32>
    %114 = arith.mulf %112, %113 : vector<8x1xf32>
    %cst_57 = arith.constant 9.99999974E-6 : f32
    %115 = vector.broadcast %cst_57 : f32 to vector<8x1xf32>
    %116 = arith.addf %114, %115 : vector<8x1xf32>
    %117 = math.rsqrt %116 : vector<8x1xf32>
    %118 = vector.broadcast %117 : vector<8x1xf32> to vector<8x128xf32>
    %119 = arith.mulf %109, %118 : vector<8x128xf32>
    %120 = vector.broadcast %98 : vector<1x128xf32> to vector<8x128xf32>
    %121 = arith.mulf %119, %120 : vector<8x128xf32>
    %122 = vector.broadcast %99 : vector<1x128xf32> to vector<8x128xf32>
    %123 = arith.addf %121, %122 : vector<8x128xf32>
    %c0_58 = arith.constant 0 : index
    %c0_59 = arith.constant 0 : index
    %124 = vector.load %arg15[%c0_58, %c0_59] : memref<8x128xf32, #tpu.memory_space<vmem>>, vector<8x128xf32>
    tpu.vector_store %arg15[%c0_58, %c0_59], %123 {strides = array<i32>} : memref<8x128xf32, #tpu.memory_space<vmem>>, vector<8x128xf32>,
    return
  }
  func.func @transform_0(%arg0: i32) -> (i32, i32) {
    %c0_i32 = arith.constant 0 : i32
    %c0_i32_0 = arith.constant 0 : i32
    return %arg0, %c0_i32 : i32, i32
  }
  func.func @transform_1(%arg0: i32) -> (i32, i32) {
    %c0_i32 = arith.constant 0 : i32
    %c0_i32_0 = arith.constant 0 : i32
    %c0_i32_1 = arith.constant 0 : i32
    return %c0_i32, %c0_i32_0 : i32, i32
  }
  func.func @transform_2(%arg0: i32) -> (i32, i32) {
    %c0_i32 = arith.constant 0 : i32
    %c0_i32_0 = arith.constant 0 : i32
    %c0_i32_1 = arith.constant 0 : i32
    return %c0_i32, %c0_i32_0 : i32, i32
  }
  func.func @transform_3(%arg0: i32) -> (i32, i32) {
    %c0_i32 = arith.constant 0 : i32
    %c0_i32_0 = arith.constant 0 : i32
    %c0_i32_1 = arith.constant 0 : i32
    return %c0_i32, %c0_i32_0 : i32, i32
  }
  func.func @transform_4(%arg0: i32) -> (i32, i32) {
    %c0_i32 = arith.constant 0 : i32
    %c0_i32_0 = arith.constant 0 : i32
    %c0_i32_1 = arith.constant 0 : i32
    return %c0_i32, %c0_i32_0 : i32, i32
  }
  func.func @transform_5(%arg0: i32) -> (i32, i32) {
    %c0_i32 = arith.constant 0 : i32
    %c0_i32_0 = arith.constant 0 : i32
    %c0_i32_1 = arith.constant 0 : i32
    return %c0_i32, %c0_i32_0 : i32, i32
  }
  func.func @transform_6(%arg0: i32) -> (i32, i32) {
    %c0_i32 = arith.constant 0 : i32
    %c0_i32_0 = arith.constant 0 : i32
    %c0_i32_1 = arith.constant 0 : i32
    return %c0_i32, %c0_i32_0 : i32, i32
  }
  func.func @transform_7(%arg0: i32) -> (i32, i32) {
    %c0_i32 = arith.constant 0 : i32
    %c0_i32_0 = arith.constant 0 : i32
    %c0_i32_1 = arith.constant 0 : i32
    return %c0_i32, %c0_i32_0 : i32, i32
  }
  func.func @transform_8(%arg0: i32) -> (i32, i32) {
    %c0_i32 = arith.constant 0 : i32
    %c0_i32_0 = arith.constant 0 : i32
    %c0_i32_1 = arith.constant 0 : i32
    return %c0_i32, %c0_i32_0 : i32, i32
  }
  func.func @transform_9(%arg0: i32) -> (i32, i32) {
    %c0_i32 = arith.constant 0 : i32
    %c0_i32_0 = arith.constant 0 : i32
    %c0_i32_1 = arith.constant 0 : i32
    return %c0_i32, %c0_i32_0 : i32, i32
  }
  func.func @transform_10(%arg0: i32) -> (i32, i32) {
    %c0_i32 = arith.constant 0 : i32
    %c0_i32_0 = arith.constant 0 : i32
    %c0_i32_1 = arith.constant 0 : i32
    return %c0_i32, %c0_i32_0 : i32, i32
  }
  func.func @transform_11(%arg0: i32) -> (i32, i32) {
    %c0_i32 = arith.constant 0 : i32
    %c0_i32_0 = arith.constant 0 : i32
    %c0_i32_1 = arith.constant 0 : i32
    return %c0_i32, %c0_i32_0 : i32, i32
  }
  func.func @transform_12(%arg0: i32) -> (i32, i32) {
    %c0_i32 = arith.constant 0 : i32
    %c0_i32_0 = arith.constant 0 : i32
    %c0_i32_1 = arith.constant 0 : i32
    return %c0_i32, %c0_i32_0 : i32, i32
  }
  func.func @transform_13(%arg0: i32) -> (i32, i32) {
    %c0_i32 = arith.constant 0 : i32
    %c0_i32_0 = arith.constant 0 : i32
    %c0_i32_1 = arith.constant 0 : i32
    return %c0_i32, %c0_i32_0 : i32, i32
  }
  func.func @transform_14(%arg0: i32) -> (i32, i32) {
    %c0_i32 = arith.constant 0 : i32
    %c0_i32_0 = arith.constant 0 : i32
    return %arg0, %c0_i32 : i32, i32
  }
}

</mosaic_0001>

<llo_original>
// kernel: decoder_layer.1
$region0: #{decoder_layer.1}
  #allocation0 [shape = 'u32[]', space=smem, size = 0x4, offset = 0x4, fixed_abs, tag = 'smem constant byte address 0x4 - core index']
  #allocation1 [shape = 'u32[144,128]{1,0:T(1,128)}', space=vmem, size = 0x12000, scoped, tag = 'internal scratch']
  %s0 = inlined_call_operand.vmem [shape: f32[8,128], index: 0, kind: input, shape index: {}]
  %s1 = inlined_call_operand.vmem [shape: f32[1,128], index: 1, kind: input, shape index: {}]
  %s2 = inlined_call_operand.vmem [shape: bf16[128,128], index: 2, kind: input, shape index: {}]
  %s3 = inlined_call_operand.vmem [shape: f32[1,128], index: 3, kind: input, shape index: {}]
  %s4 = inlined_call_operand.vmem [shape: bf16[128,128], index: 4, kind: input, shape index: {}]
  %s5 = inlined_call_operand.vmem [shape: f32[1,128], index: 5, kind: input, shape index: {}]
  %s6 = inlined_call_operand.vmem [shape: bf16[128,128], index: 6, kind: input, shape index: {}]
  %s7 = inlined_call_operand.vmem [shape: f32[1,128], index: 7, kind: input, shape index: {}]
  %s8 = inlined_call_operand.vmem [shape: bf16[128,128], index: 8, kind: input, shape index: {}]
  %s9 = inlined_call_operand.vmem [shape: f32[1,128], index: 9, kind: input, shape index: {}]
  %s10 = inlined_call_operand.vmem [shape: f32[1,128], index: 10, kind: input, shape index: {}]
  %s11 = inlined_call_operand.vmem [shape: f32[1,128], index: 11, kind: input, shape index: {}]
  %s12 = inlined_call_operand.vmem [shape: f32[1,128], index: 12, kind: input, shape index: {}]
  %s13 = inlined_call_operand.vmem [shape: f32[1,128], index: 13, kind: input, shape index: {}]
  %s14 = inlined_call_operand.vmem [shape: f32[8,128], index: 14, kind: output, shape index: {}]
  %s15 = sld [smem:[#allocation0]]
  $region66: #{decoder_layer.1} parent=0
    _
  %s17 = ssub.s32 1, %s15
  %s18 = scalar_select 0, %s17, %s15
  // Predicated region
  $region2: #{decoder_layer.1} parent=0 // pred_check
    _
  $region3: #{decoder_layer.1} parent=0 // pred_check_branch
    %20 = sbr.rel (0) target = $region5
  $region4: #{decoder_layer.1} parent=0 // pred_region
    _
  $region5: #{decoder_layer.1} parent=0 // pred_fallthru
    _
  // Predicated region
  $region6: #{decoder_layer.1} parent=0 // pred_check
    _
  $region7: #{decoder_layer.1} parent=0 // pred_check_branch
    %22 = sbr.rel (0) target = $region9
  $region8: #{decoder_layer.1} parent=0 // pred_region
    _
  $region9: #{decoder_layer.1} parent=0 // pred_fallthru
    _
  // Predicated region
  $region10: #{decoder_layer.1} parent=0 // pred_check
    _
  $region11: #{decoder_layer.1} parent=0 // pred_check_branch
    %24 = sbr.rel (0) target = $region13
  $region12: #{decoder_layer.1} parent=0 // pred_region
    _
  $region13: #{decoder_layer.1} parent=0 // pred_fallthru
    _
  // Predicated region
  $region14: #{decoder_layer.1} parent=0 // pred_check
    _
  $region15: #{decoder_layer.1} parent=0 // pred_check_branch
    %26 = sbr.rel (0) target = $region17
  $region16: #{decoder_layer.1} parent=0 // pred_region
    _
  $region17: #{decoder_layer.1} parent=0 // pred_fallthru
    _
  // Predicated region
  $region18: #{decoder_layer.1} parent=0 // pred_check
    _
  $region19: #{decoder_layer.1} parent=0 // pred_check_branch
    %28 = sbr.rel (0) target = $region21
  $region20: #{decoder_layer.1} parent=0 // pred_region
    _
  $region21: #{decoder_layer.1} parent=0 // pred_fallthru
    _
  // Predicated region
  $region22: #{decoder_layer.1} parent=0 // pred_check
    _
  $region23: #{decoder_layer.1} parent=0 // pred_check_branch
    %30 = sbr.rel (0) target = $region25
  $region24: #{decoder_layer.1} parent=0 // pred_region
    _
  $region25: #{decoder_layer.1} parent=0 // pred_fallthru
    _
  // Predicated region
  $region26: #{decoder_layer.1} parent=0 // pred_check
    _
  $region27: #{decoder_layer.1} parent=0 // pred_check_branch
    %32 = sbr.rel (0) target = $region29
  $region28: #{decoder_layer.1} parent=0 // pred_region
    _
  $region29: #{decoder_layer.1} parent=0 // pred_fallthru
    _
  // Predicated region
  $region30: #{decoder_layer.1} parent=0 // pred_check
    _
  $region31: #{decoder_layer.1} parent=0 // pred_check_branch
    %34 = sbr.rel (0) target = $region33
  $region32: #{decoder_layer.1} parent=0 // pred_region
    _
  $region33: #{decoder_layer.1} parent=0 // pred_fallthru
    _
  // Predicated region
  $region34: #{decoder_layer.1} parent=0 // pred_check
    _
  $region35: #{decoder_layer.1} parent=0 // pred_check_branch
    %36 = sbr.rel (0) target = $region37
  $region36: #{decoder_layer.1} parent=0 // pred_region
    _
  $region37: #{decoder_layer.1} parent=0 // pred_fallthru
    _
  // Predicated region
  $region38: #{decoder_layer.1} parent=0 // pred_check
    _
  $region39: #{decoder_layer.1} parent=0 // pred_check_branch
    %38 = sbr.rel (0) target = $region41
  $region40: #{decoder_layer.1} parent=0 // pred_region
    _
  $region41: #{decoder_layer.1} parent=0 // pred_fallthru
    _
  // Predicated region
  $region42: #{decoder_layer.1} parent=0 // pred_check
    _
  $region43: #{decoder_layer.1} parent=0 // pred_check_branch
    %40 = sbr.rel (0) target = $region45
  $region44: #{decoder_layer.1} parent=0 // pred_region
    _
  $region45: #{decoder_layer.1} parent=0 // pred_fallthru
    _
  // Predicated region
  $region46: #{decoder_layer.1} parent=0 // pred_check
    _
  $region47: #{decoder_layer.1} parent=0 // pred_check_branch
    %42 = sbr.rel (0) target = $region49
  $region48: #{decoder_layer.1} parent=0 // pred_region
    _
  $region49: #{decoder_layer.1} parent=0 // pred_fallthru
    _
  // Predicated region
  $region50: #{decoder_layer.1} parent=0 // pred_check
    _
  $region51: #{decoder_layer.1} parent=0 // pred_check_branch
    %44 = sbr.rel (0) target = $region53
  $region52: #{decoder_layer.1} parent=0 // pred_region
    _
  $region53: #{decoder_layer.1} parent=0 // pred_fallthru
    _
  // Predicated region
  $region54: #{decoder_layer.1} parent=0 // pred_check
    _
  $region55: #{decoder_layer.1} parent=0 // pred_check_branch
    %46 = sbr.rel (0) target = $region57
  $region56: #{decoder_layer.1} parent=0 // pred_region
    _
  $region57: #{decoder_layer.1} parent=0 // pred_fallthru
    _
  %v48 = vld [vmem:[%s0] sm:$0xff]
  %v49 = vld [vmem:[%s1] sm:$0x1]
  %v50 = vpack.c.bf16 %v49, %v49
  %v51 = vld [vmem:[%s2] sm:$0xf]
  %v52 = vld [vmem:[%s2 + $0x4] sm:$0xf]
  %v53 = vld [vmem:[%s2 + $0x8] sm:$0xf]
  %v54 = vld [vmem:[%s2 + $0xc] sm:$0xf]
  %v55 = vld [vmem:[%s2 + $0x10] sm:$0xf]
  %v56 = vld [vmem:[%s2 + $0x14] sm:$0xf]
  %v57 = vld [vmem:[%s2 + $0x18] sm:$0xf]
  %v58 = vld [vmem:[%s2 + $0x1c] sm:$0xf]
  %v59 = vld [vmem:[%s2 + $0x20] sm:$0xf]
  %v60 = vld [vmem:[%s2 + $0x24] sm:$0xf]
  %v61 = vld [vmem:[%s2 + $0x28] sm:$0xf]
  %v62 = vld [vmem:[%s2 + $0x2c] sm:$0xf]
  %v63 = vld [vmem:[%s2 + $0x30] sm:$0xf]
  %v64 = vld [vmem:[%s2 + $0x34] sm:$0xf]
  %v65 = vld [vmem:[%s2 + $0x38] sm:$0xf]
  %v66 = vld [vmem:[%s2 + $0x3c] sm:$0xf]
  %v67 = vld [vmem:[%s3] sm:$0x1]
  %v68 = vmul.f32 %v67, 8.0
  %v85 = vunpack.c.l.b16 %v51
  %v86 = vunpack.c.l.b16 %v52
  %v87 = vunpack.c.l.b16 %v53
  %v88 = vunpack.c.l.b16 %v54
  %v89 = vunpack.c.l.b16 %v55
  %v90 = vunpack.c.l.b16 %v56
  %v91 = vunpack.c.l.b16 %v57
  %v92 = vunpack.c.l.b16 %v58
  %v93 = vunpack.c.l.b16 %v59
  %v94 = vunpack.c.l.b16 %v60
  %v95 = vunpack.c.l.b16 %v61
  %v96 = vunpack.c.l.b16 %v62
  %v97 = vunpack.c.l.b16 %v63
  %v98 = vunpack.c.l.b16 %v64
  %v99 = vunpack.c.l.b16 %v65
  %v100 = vunpack.c.l.b16 %v66
  %v101 = vpack.c.b16 %v86, %v85
  %v102 = vpack.c.b16 %v88, %v87
  %v103 = vpack.c.b16 %v90, %v89
  %v104 = vpack.c.b16 %v92, %v91
  %v105 = vpack.c.b16 %v94, %v93
  %v106 = vpack.c.b16 %v96, %v95
  %v107 = vpack.c.b16 %v98, %v97
  %v108 = vpack.c.b16 %v100, %v99
  %117 = vmatprep.subr.bf16.mxu0 0
  %118 = vmatpush1.bf16.msra.mxu0 %v101
  %119 = vmatprep.subr.bf16.mxu0 0
  %120 = vmatpush1.bf16.msra.mxu0 %v102
  %121 = vmatprep.subr.bf16.mxu0 0
  %122 = vmatpush1.bf16.msra.mxu0 %v103
  %123 = vmatprep.subr.bf16.mxu0 0
  %124 = vmatpush1.bf16.msra.mxu0 %v104
  %125 = vmatprep.subr.bf16.mxu0 0
  %126 = vmatpush1.bf16.msra.mxu0 %v105
  %127 = vmatprep.subr.bf16.mxu0 0
  %128 = vmatpush1.bf16.msra.mxu0 %v106
  %129 = vmatprep.subr.bf16.mxu0 0
  %130 = vmatpush1.bf16.msra.mxu0 %v107
  %131 = vmatprep.subr.bf16.mxu0 0
  %132 = vmatpush1.bf16.msra.mxu0 %v108
  %133 = vmatprep.subr.bf16.mxu0 0
  %134 = vmatpush1.bf16.msra.mxu0 0
  %135 = vmatprep.subr.bf16.mxu0 0
  %136 = vmatpush1.bf16.msra.mxu0 0
  %137 = vmatprep.subr.bf16.mxu0 0
  %138 = vmatpush1.bf16.msra.mxu0 0
  %139 = vmatprep.subr.bf16.mxu0 0
  %140 = vmatpush1.bf16.msra.mxu0 0
  %141 = vmatprep.subr.bf16.mxu0 0
  %142 = vmatpush1.bf16.msra.mxu0 0
  %143 = vmatprep.subr.bf16.mxu0 0
  %144 = vmatpush1.bf16.msra.mxu0 0
  %145 = vmatprep.subr.bf16.mxu0 0
  %146 = vmatpush1.bf16.msra.mxu0 0
  %147 = vmatprep.subr.bf16.mxu0 0
  %148 = vmatpush1.bf16.msra.mxu0 0
  %149 = vmatprep.mubr.bf16.mxu0 0
  %150 = vmatmul.mubr.bf16.gmra.mrb[0].mxu0 %v50
  %v151 = vpop.f32.mrb[0].mxu0
  %v152 = vadd.f32 %v68, %v151
  %v153 = vpop.f32.mrb[0].mxu0
  %v154 = vpop.f32.mrb[0].mxu0
  %v155 = vpop.f32.mrb[0].mxu0
  %156 = vdwg.mxu0
  %v157 = vpack.c.bf16 %v152, %v152
  %v158 = vld [vmem:[%s4] sm:$0xf]
  %v159 = vld [vmem:[%s4 + $0x4] sm:$0xf]
  %v160 = vld [vmem:[%s4 + $0x8] sm:$0xf]
  %v161 = vld [vmem:[%s4 + $0xc] sm:$0xf]
  %v162 = vld [vmem:[%s4 + $0x10] sm:$0xf]
  %v163 = vld [vmem:[%s4 + $0x14] sm:$0xf]
  %v164 = vld [vmem:[%s4 + $0x18] sm:$0xf]
  %v165 = vld [vmem:[%s4 + $0x1c] sm:$0xf]
  %v166 = vld [vmem:[%s4 + $0x20] sm:$0xf]
  %v167 = vld [vmem:[%s4 + $0x24] sm:$0xf]
  %v168 = vld [vmem:[%s4 + $0x28] sm:$0xf]
  %v169 = vld [vmem:[%s4 + $0x2c] sm:$0xf]
  %v170 = vld [vmem:[%s4 + $0x30] sm:$0xf]
  %v171 = vld [vmem:[%s4 + $0x34] sm:$0xf]
  %v172 = vld [vmem:[%s4 + $0x38] sm:$0xf]
  %v173 = vld [vmem:[%s4 + $0x3c] sm:$0xf]
  %v174 = vld [vmem:[%s5] sm:$0x1]
  %v191 = vunpack.c.l.b16 %v158
  %v192 = vunpack.c.l.b16 %v159
  %v193 = vunpack.c.l.b16 %v160
  %v194 = vunpack.c.l.b16 %v161
  %v195 = vunpack.c.l.b16 %v162
  %v196 = vunpack.c.l.b16 %v163
  %v197 = vunpack.c.l.b16 %v164
  %v198 = vunpack.c.l.b16 %v165
  %v199 = vunpack.c.l.b16 %v166
  %v200 = vunpack.c.l.b16 %v167
  %v201 = vunpack.c.l.b16 %v168
  %v202 = vunpack.c.l.b16 %v169
  %v203 = vunpack.c.l.b16 %v170
  %v204 = vunpack.c.l.b16 %v171
  %v205 = vunpack.c.l.b16 %v172
  %v206 = vunpack.c.l.b16 %v173
  %v207 = vpack.c.b16 %v192, %v191
  %v208 = vpack.c.b16 %v194, %v193
  %v209 = vpack.c.b16 %v196, %v195
  %v210 = vpack.c.b16 %v198, %v197
  %v211 = vpack.c.b16 %v200, %v199
  %v212 = vpack.c.b16 %v202, %v201
  %v213 = vpack.c.b16 %v204, %v203
  %v214 = vpack.c.b16 %v206, %v205
  %223 = vmatprep.subr.bf16.mxu0 0
  %224 = vmatpush1.bf16.msra.mxu0 %v207
  %225 = vmatprep.subr.bf16.mxu0 0
  %226 = vmatpush1.bf16.msra.mxu0 %v208
  %227 = vmatprep.subr.bf16.mxu0 0
  %228 = vmatpush1.bf16.msra.mxu0 %v209
  %229 = vmatprep.subr.bf16.mxu0 0
  %230 = vmatpush1.bf16.msra.mxu0 %v210
  %231 = vmatprep.subr.bf16.mxu0 0
  %232 = vmatpush1.bf16.msra.mxu0 %v211
  %233 = vmatprep.subr.bf16.mxu0 0
  %234 = vmatpush1.bf16.msra.mxu0 %v212
  %235 = vmatprep.subr.bf16.mxu0 0
  %236 = vmatpush1.bf16.msra.mxu0 %v213
  %237 = vmatprep.subr.bf16.mxu0 0
  %238 = vmatpush1.bf16.msra.mxu0 %v214
  %239 = vmatprep.subr.bf16.mxu0 0
  %240 = vmatpush1.bf16.msra.mxu0 0
  %241 = vmatprep.subr.bf16.mxu0 0
  %242 = vmatpush1.bf16.msra.mxu0 0
  %243 = vmatprep.subr.bf16.mxu0 0
  %244 = vmatpush1.bf16.msra.mxu0 0
  %245 = vmatprep.subr.bf16.mxu0 0
  %246 = vmatpush1.bf16.msra.mxu0 0
  %247 = vmatprep.subr.bf16.mxu0 0
  %248 = vmatpush1.bf16.msra.mxu0 0
  %249 = vmatprep.subr.bf16.mxu0 0
  %250 = vmatpush1.bf16.msra.mxu0 0
  %251 = vmatprep.subr.bf16.mxu0 0
  %252 = vmatpush1.bf16.msra.mxu0 0
  %253 = vmatprep.subr.bf16.mxu0 0
  %254 = vmatpush1.bf16.msra.mxu0 0
  %255 = vmatprep.mubr.bf16.mxu0 0
  %256 = vmatmul.mubr.bf16.gmra.mrb[0].mxu0 %v157
  %v257 = vpop.f32.mrb[0].mxu0
  %v258 = vadd.f32 %v174, %v257
  %v259 = vpop.f32.mrb[0].mxu0
  %v260 = vpop.f32.mrb[0].mxu0
  %v261 = vpop.f32.mrb[0].mxu0
  %262 = vdwg.mxu0
  %v263 = vlaneseq
  %v264 = vand.u32 %v263, 127
  %vm265 = vcmp.lt.s32.totalorder %v264, 32
  %v266 = vlaneseq
  %v267 = vshrl.u32 %v266, 7
  %v268 = vsub.s32 0, %v267
  %v269 = vrot.slane %v258, %v268
  %v270 = vadd.f32 %v48, %v269
  %v271 = vld [vmem:[%s10] sm:$0x1]
  %v272 = vld [vmem:[%s11] sm:$0x1]
  %273 = vadd.xlane.f32.xlu0 %v270
  %v274 = vpop.xlane.xlu0 %273
  %v275 = vmul.f32 %v274, 0.03125
  %v276 = vsub.f32 %v270, %v275
  %v277 = vsel %vm265, 1, 0
  %vm278 = vcmp.eq.s32.totalorder %v277, 1
  %v279 = vsel %vm278, %v276, 0.0
  %v280 = vmul.f32 %v279, %v279
  %281 = vadd.xlane.f32.xlu0 %v280
  %v282 = vpop.xlane.xlu0 %281
  %v283 = vmul.f32 %v282, 0.03125
  %v284 = vadd.f32 %v283, 1e-05
  %v285 = vrsqrt.pop %v284
  %v286 = vmul.f32 %v279, %v285
  %v288 = vlaneseq
  %v289 = vshrl.u32 %v288, 7
  %v290 = vsub.s32 0, %v289
  %v291 = vrot.slane %v271, %v290
  %v293 = vmul.f32 %v286, %v291
  %v295 = vlaneseq
  %v296 = vshrl.u32 %v295, 7
  %v297 = vsub.s32 0, %v296
  %v298 = vrot.slane %v272, %v297
  %v300 = vadd.f32 %v293, %v298
  %v301 = vpack.c.bf16 %v300, %v300
  %v302 = vld [vmem:[%s6] sm:$0xf]
  %v303 = vld [vmem:[%s6 + $0x4] sm:$0xf]
  %v304 = vld [vmem:[%s6 + $0x8] sm:$0xf]
  %v305 = vld [vmem:[%s6 + $0xc] sm:$0xf]
  %v306 = vld [vmem:[%s6 + $0x10] sm:$0xf]
  %v307 = vld [vmem:[%s6 + $0x14] sm:$0xf]
  %v308 = vld [vmem:[%s6 + $0x18] sm:$0xf]
  %v309 = vld [vmem:[%s6 + $0x1c] sm:$0xf]
  %v310 = vld [vmem:[%s6 + $0x20] sm:$0xf]
  %v311 = vld [vmem:[%s6 + $0x24] sm:$0xf]
  %v312 = vld [vmem:[%s6 + $0x28] sm:$0xf]
  %v313 = vld [vmem:[%s6 + $0x2c] sm:$0xf]
  %v314 = vld [vmem:[%s6 + $0x30] sm:$0xf]
  %v315 = vld [vmem:[%s6 + $0x34] sm:$0xf]
  %v316 = vld [vmem:[%s6 + $0x38] sm:$0xf]
  %v317 = vld [vmem:[%s6 + $0x3c] sm:$0xf]
  %v318 = vld [vmem:[%s7] sm:$0x1]
  %v320 = vlaneseq
  %v321 = vshrl.u32 %v320, 7
  %v322 = vsub.s32 0, %v321
  %v323 = vrot.slane %v318, %v322
  %v341 = vunpack.c.l.b16 %v302
  %v342 = vunpack.c.l.b16 %v303
  %v343 = vunpack.c.l.b16 %v304
  %v344 = vunpack.c.l.b16 %v305
  %v345 = vunpack.c.l.b16 %v306
  %v346 = vunpack.c.l.b16 %v307
  %v347 = vunpack.c.l.b16 %v308
  %v348 = vunpack.c.l.b16 %v309
  %v349 = vunpack.c.l.b16 %v310
  %v350 = vunpack.c.l.b16 %v311
  %v351 = vunpack.c.l.b16 %v312
  %v352 = vunpack.c.l.b16 %v313
  %v353 = vunpack.c.l.b16 %v314
  %v354 = vunpack.c.l.b16 %v315
  %v355 = vunpack.c.l.b16 %v316
  %v356 = vunpack.c.l.b16 %v317
  %v357 = vpack.c.b16 %v342, %v341
  %v358 = vpack.c.b16 %v344, %v343
  %v359 = vpack.c.b16 %v346, %v345
  %v360 = vpack.c.b16 %v348, %v347
  %v361 = vpack.c.b16 %v350, %v349
  %v362 = vpack.c.b16 %v352, %v351
  %v363 = vpack.c.b16 %v354, %v353
  %v364 = vpack.c.b16 %v356, %v355
  %373 = vmatprep.subr.bf16.mxu0 0
  %374 = vmatpush1.bf16.msra.mxu0 %v357
  %375 = vmatprep.subr.bf16.mxu0 0
  %376 = vmatpush1.bf16.msra.mxu0 %v358
  %377 = vmatprep.subr.bf16.mxu0 0
  %378 = vmatpush1.bf16.msra.mxu0 %v359
  %379 = vmatprep.subr.bf16.mxu0 0
  %380 = vmatpush1.bf16.msra.mxu0 %v360
  %381 = vmatprep.subr.bf16.mxu0 0
  %382 = vmatpush1.bf16.msra.mxu0 %v361
  %383 = vmatprep.subr.bf16.mxu0 0
  %384 = vmatpush1.bf16.msra.mxu0 %v362
  %385 = vmatprep.subr.bf16.mxu0 0
  %386 = vmatpush1.bf16.msra.mxu0 %v363
  %387 = vmatprep.subr.bf16.mxu0 0
  %388 = vmatpush1.bf16.msra.mxu0 %v364
  %389 = vmatprep.subr.bf16.mxu0 0
  %390 = vmatpush1.bf16.msra.mxu0 0
  %391 = vmatprep.subr.bf16.mxu0 0
  %392 = vmatpush1.bf16.msra.mxu0 0
  %393 = vmatprep.subr.bf16.mxu0 0
  %394 = vmatpush1.bf16.msra.mxu0 0
  %395 = vmatprep.subr.bf16.mxu0 0
  %396 = vmatpush1.bf16.msra.mxu0 0
  %397 = vmatprep.subr.bf16.mxu0 0
  %398 = vmatpush1.bf16.msra.mxu0 0
  %399 = vmatprep.subr.bf16.mxu0 0
  %400 = vmatpush1.bf16.msra.mxu0 0
  %401 = vmatprep.subr.bf16.mxu0 0
  %402 = vmatpush1.bf16.msra.mxu0 0
  %403 = vmatprep.subr.bf16.mxu0 0
  %404 = vmatpush1.bf16.msra.mxu0 0
  %405 = vmatprep.mubr.bf16.mxu0 0
  %406 = vmatmul.mubr.bf16.gmra.mrb[0].mxu0 %v301
  %v407 = vpop.f32.mrb[0].mxu0
  %v408 = vadd.f32 %v323, %v407
  %v409 = vpop.f32.mrb[0].mxu0
  %v410 = vpop.f32.mrb[0].mxu0
  %v411 = vpop.f32.mrb[0].mxu0
  %412 = vdwg.mxu0
  %v413 = vmul.f32 %v408, 0.5
  %v414 = vmul.f32 %v408, 0.70710677
  %v415 = vand.u32 2147483647, %v414
  %v416 = vmul.f32 %v415, 0.3275911
  %v417 = vadd.f32 %v416, 1.0
  %v418 = vrcp.pop %v417
  %v419 = vmul.f32 1.0, %v418
  %v420 = vmul.f32 %v419, 1.0614054
  %v421 = vadd.f32 %v420, -1.4531521
  %v422 = vmul.f32 %v421, %v419
  %v423 = vadd.f32 %v422, 1.4214138
  %v424 = vmul.f32 %v423, %v419
  %v425 = vadd.f32 %v424, -0.28449672
  %v426 = vmul.f32 %v425, %v419
  %v427 = vadd.f32 %v426, 0.2548296
  %v428 = vmul.f32 %v427, %v419
  %v429 = vsub.f32 0.0, %v415
  %v430 = vmul.f32 %v429, %v415
  %v431 = vmul.f32 %v430, 1.442695
  %v432 = vpow.pop %v431
  %v433 = vmul.f32 %v428, %v432
  %v434 = vsub.f32 1.0, %v433
  %vm435 = vcmp.lt.f32.partialorder %v414, 0.0
  %v436 = vsub.f32 0.0, %v434
  %v437 = vsel %vm435, %v436, %v434
  %v438 = vadd.f32 %v437, 1.0
  %v439 = vmul.f32 %v413, %v438
  %v440 = vpack.c.bf16 %v439, %v439
  %v441 = vld [vmem:[%s8] sm:$0xf]
  %v442 = vld [vmem:[%s8 + $0x4] sm:$0xf]
  %v443 = vld [vmem:[%s8 + $0x8] sm:$0xf]
  %v444 = vld [vmem:[%s8 + $0xc] sm:$0xf]
  %v445 = vld [vmem:[%s8 + $0x10] sm:$0xf]
  %v446 = vld [vmem:[%s8 + $0x14] sm:$0xf]
  %v447 = vld [vmem:[%s8 + $0x18] sm:$0xf]
  %v448 = vld [vmem:[%s8 + $0x1c] sm:$0xf]
  %v449 = vld [vmem:[%s8 + $0x20] sm:$0xf]
  %v450 = vld [vmem:[%s8 + $0x24] sm:$0xf]
  %v451 = vld [vmem:[%s8 + $0x28] sm:$0xf]
  %v452 = vld [vmem:[%s8 + $0x2c] sm:$0xf]
  %v453 = vld [vmem:[%s8 + $0x30] sm:$0xf]
  %v454 = vld [vmem:[%s8 + $0x34] sm:$0xf]
  %v455 = vld [vmem:[%s8 + $0x38] sm:$0xf]
  %v456 = vld [vmem:[%s8 + $0x3c] sm:$0xf]
  %v457 = vld [vmem:[%s9] sm:$0x1]
  %v459 = vlaneseq
  %v460 = vshrl.u32 %v459, 7
  %v461 = vsub.s32 0, %v460
  %v462 = vrot.slane %v457, %v461
  %v480 = vunpack.c.l.b16 %v441
  %v481 = vunpack.c.l.b16 %v442
  %v482 = vunpack.c.l.b16 %v443
  %v483 = vunpack.c.l.b16 %v444
  %v484 = vunpack.c.l.b16 %v445
  %v485 = vunpack.c.l.b16 %v446
  %v486 = vunpack.c.l.b16 %v447
  %v487 = vunpack.c.l.b16 %v448
  %v488 = vunpack.c.l.b16 %v449
  %v489 = vunpack.c.l.b16 %v450
  %v490 = vunpack.c.l.b16 %v451
  %v491 = vunpack.c.l.b16 %v452
  %v492 = vunpack.c.l.b16 %v453
  %v493 = vunpack.c.l.b16 %v454
  %v494 = vunpack.c.l.b16 %v455
  %v495 = vunpack.c.l.b16 %v456
  %v496 = vpack.c.b16 %v481, %v480
  %v497 = vpack.c.b16 %v483, %v482
  %v498 = vpack.c.b16 %v485, %v484
  %v499 = vpack.c.b16 %v487, %v486
  %v500 = vpack.c.b16 %v489, %v488
  %v501 = vpack.c.b16 %v491, %v490
  %v502 = vpack.c.b16 %v493, %v492
  %v503 = vpack.c.b16 %v495, %v494
  %512 = vmatprep.subr.bf16.mxu0 0
  %513 = vmatpush1.bf16.msra.mxu0 %v496
  %514 = vmatprep.subr.bf16.mxu0 0
  %515 = vmatpush1.bf16.msra.mxu0 %v497
  %516 = vmatprep.subr.bf16.mxu0 0
  %517 = vmatpush1.bf16.msra.mxu0 %v498
  %518 = vmatprep.subr.bf16.mxu0 0
  %519 = vmatpush1.bf16.msra.mxu0 %v499
  %520 = vmatprep.subr.bf16.mxu0 0
  %521 = vmatpush1.bf16.msra.mxu0 %v500
  %522 = vmatprep.subr.bf16.mxu0 0
  %523 = vmatpush1.bf16.msra.mxu0 %v501
  %524 = vmatprep.subr.bf16.mxu0 0
  %525 = vmatpush1.bf16.msra.mxu0 %v502
  %526 = vmatprep.subr.bf16.mxu0 0
  %527 = vmatpush1.bf16.msra.mxu0 %v503
  %528 = vmatprep.subr.bf16.mxu0 0
  %529 = vmatpush1.bf16.msra.mxu0 0
  %530 = vmatprep.subr.bf16.mxu0 0
  %531 = vmatpush1.bf16.msra.mxu0 0
  %532 = vmatprep.subr.bf16.mxu0 0
  %533 = vmatpush1.bf16.msra.mxu0 0
  %534 = vmatprep.subr.bf16.mxu0 0
  %535 = vmatpush1.bf16.msra.mxu0 0
  %536 = vmatprep.subr.bf16.mxu0 0
  %537 = vmatpush1.bf16.msra.mxu0 0
  %538 = vmatprep.subr.bf16.mxu0 0
  %539 = vmatpush1.bf16.msra.mxu0 0
  %540 = vmatprep.subr.bf16.mxu0 0
  %541 = vmatpush1.bf16.msra.mxu0 0
  %542 = vmatprep.subr.bf16.mxu0 0
  %543 = vmatpush1.bf16.msra.mxu0 0
  %544 = vmatprep.mubr.bf16.mxu0 0
  %545 = vmatmul.mubr.bf16.gmra.mrb[0].mxu0 %v440
  %v546 = vpop.f32.mrb[0].mxu0
  %v547 = vadd.f32 %v462, %v546
  %v548 = vpop.f32.mrb[0].mxu0
  %v549 = vpop.f32.mrb[0].mxu0
  %v550 = vpop.f32.mrb[0].mxu0
  %551 = vdwg.mxu0
  %v552 = vadd.f32 %v300, %v547
  %v553 = vld [vmem:[%s12] sm:$0x1]
  %v554 = vld [vmem:[%s13] sm:$0x1]
  %555 = vadd.xlane.f32.xlu0 %v552
  %v556 = vpop.xlane.xlu0 %555
  %v557 = vmul.f32 %v556, 0.03125
  %v558 = vsub.f32 %v552, %v557
  %v559 = vsel %vm278, %v558, 0.0
  %v560 = vmul.f32 %v559, %v559
  %561 = vadd.xlane.f32.xlu0 %v560
  %v562 = vpop.xlane.xlu0 %561
  %v563 = vmul.f32 %v562, 0.03125
  %v564 = vadd.f32 %v563, 1e-05
  %v565 = vrsqrt.pop %v564
  %v566 = vmul.f32 %v559, %v565
  %v568 = vlaneseq
  %v569 = vshrl.u32 %v568, 7
  %v570 = vsub.s32 0, %v569
  %v571 = vrot.slane %v553, %v570
  %v573 = vmul.f32 %v566, %v571
  %v575 = vlaneseq
  %v576 = vshrl.u32 %v575, 7
  %v577 = vsub.s32 0, %v576
  %v578 = vrot.slane %v554, %v577
  %v580 = vadd.f32 %v573, %v578
  %581 = vst [vmem:[%s14] sm:$0xff] %v580
  // Predicated region
  $region58: #{decoder_layer.1} parent=0 // pred_check
    _
  $region59: #{decoder_layer.1} parent=0 // pred_check_branch
    %583 = sbr.rel (0) target = $region61
  $region60: #{decoder_layer.1} parent=0 // pred_region
    _
  $region61: #{decoder_layer.1} parent=0 // pred_fallthru
    _
  // Predicated region
  $region62: #{decoder_layer.1} parent=0 // pred_check
    _
  $region63: #{decoder_layer.1} parent=0 // pred_check_branch
    %585 = sbr.rel (0) target = $region65
  $region64: #{decoder_layer.1} parent=0 // pred_region
    _
  $region65: #{decoder_layer.1} parent=0 // pred_fallthru
    _

</llo_original>
